<compile_context>
chip_gen: v5e
topology: v5e:2x2
jax: 0.10.0
libtpu: 0.0.40
codegen_flags: <defaults>
</compile_context>

<pallas_src>
import functools
import math

import jax
import jax.numpy as jnp
from jax import lax
from jax.experimental import pallas as pl
from jax.experimental.pallas import tpu as pltpu

QKV_DIMS = 3
# >= the scoped default on v5e/v6e/v7x and below physical VMEM on every generation.
_VMEM_LIMIT = 32 * 1024 * 1024


def _pick_tile(dim, cap, align):
    """Largest tile <= cap that is a multiple of `align` and divides `dim`; else the full dim."""
    if dim <= cap:
        return dim
    t = (cap // align) * align
    while t >= align:
        if dim % t == 0:
            return t
        t -= align
    return dim


# ---------------------------------------------------------------------------
# Tiled linear:  y = x @ w_t + b      (w_t already transposed to (in, out))
# ---------------------------------------------------------------------------
def _linear_kernel(x_ref, w_ref, b_ref, o_ref, acc_ref):
    @pl.when(pl.program_id(2) == 0)
    def _init():
        acc_ref[...] = jnp.zeros_like(acc_ref)

    # bf16 x bf16 -> f32 accumulation on the MXU.
    acc_ref[...] += jnp.dot(x_ref[...], w_ref[...], preferred_element_type=jnp.float32)

    @pl.when(pl.program_id(2) == pl.num_programs(2) - 1)
    def _finalize():
        o_ref[...] = (acc_ref[...] + b_ref[...]).astype(o_ref.dtype)


def _linear(x2d, w_t, b, out_dtype):
    M, K = x2d.shape
    N = w_t.shape[1]
    # Tile caps chosen to stay well within VMEM with double-buffered inputs on all generations
    # (halve for v7x only if these are grown substantially).
    tm = _pick_tile(M, 256, 8)
    tn = _pick_tile(N, 512, 128)
    tk = _pick_tile(K, 512, 128)
    grid = (M // tm, N // tn, K // tk)
    return pl.pallas_call(
        _linear_kernel,
        out_shape=jax.ShapeDtypeStruct((M, N), out_dtype),
        grid=grid,
        in_specs=[
            pl.BlockSpec((tm, tk), lambda i, j, k: (i, k)),
            pl.BlockSpec((tk, tn), lambda i, j, k: (k, j)),
            pl.BlockSpec((1, tn), lambda i, j, k: (0, j)),
        ],
        out_specs=pl.BlockSpec((tm, tn), lambda i, j, k: (i, j)),
        scratch_shapes=[pltpu.VMEM((tm, tn), jnp.float32)],
        compiler_params=pltpu.CompilerParams(
            dimension_semantics=("parallel", "parallel", "arbitrary"),
            vmem_limit_bytes=_VMEM_LIMIT,
        ),
    )(x2d, w_t, b.reshape(1, N))


# ---------------------------------------------------------------------------
# Scaled-dot-product attention over the packed (B, S, 3E) qkv activations.
# ---------------------------------------------------------------------------
def _attn_kernel(num_heads, head_dim, q_ref, kv_ref, o_ref, attn_ref):
    # q_ref   : (1, tq, 3E) bf16 -- q-rows block of the packed qkv activations (q pre-scaled).
    # kv_ref  : (1, S,  3E) bf16 -- full-sequence block (keys / values for all heads).
    # o_ref   : (1, tq, E)  bf16 -- attn @ V, already merged to (seq, H*Dh).
    # attn_ref: (1, H, tq, S) f32 -- softmax(Q K^T / sqrt(Dh)) per head.
    vals = []
    for h in range(num_heads):  # static unroll (num_heads is small)
        base = h * QKV_DIMS * head_dim
        q = q_ref[0, :, base: base + head_dim]                       # (tq, Dh)
        k = kv_ref[0, :, base + head_dim: base + 2 * head_dim]       # (S,  Dh)
        v = kv_ref[0, :, base + 2 * head_dim: base + 3 * head_dim]   # (S,  Dh)

        # q . k^T without an explicit transpose (contract last dims); f32 logits.
        logits = lax.dot_general(q, k, (((1,), (1,)), ((), ())),
                                 preferred_element_type=jnp.float32)  # (tq, S)
        m = jnp.max(logits, axis=-1, keepdims=True)
        p = jnp.exp(logits - m)
        attn = p * pl.reciprocal(jnp.sum(p, axis=-1, keepdims=True), approx=True)
        attn_ref[0, h] = attn

        vals.append(
            jnp.dot(attn.astype(v.dtype), v,
                    preferred_element_type=jnp.float32).astype(o_ref.dtype)
        )

    # Single lane-dense store of all heads, already in the merged (seq, H*Dh) layout.
    o_ref[0] = jnp.concatenate(vals, axis=-1)


def _attention(qkv, num_heads, head_dim):
    B, S, three_e = qkv.shape
    E = num_heads * head_dim
    tq = _pick_tile(S, 256, 8)
    kernel = functools.partial(_attn_kernel, num_heads, head_dim)
    return pl.pallas_call(
        kernel,
        out_shape=(
            jax.ShapeDtypeStruct((B, S, E), qkv.dtype),
            jax.ShapeDtypeStruct((B, num_heads, S, S), jnp.float32),
        ),
        grid=(B, S // tq),
        in_specs=[
            pl.BlockSpec((1, tq, three_e), lambda b, qi: (b, qi, 0)),  # q rows
            pl.BlockSpec((1, S, three_e), lambda b, qi: (b, 0, 0)),    # full K/V rows
        ],
        out_specs=(
            pl.BlockSpec((1, tq, E), lambda b, qi: (b, qi, 0)),
            pl.BlockSpec((1, num_heads, tq, S), lambda b, qi: (b, 0, qi, 0)),
        ),
        compiler_params=pltpu.CompilerParams(
            dimension_semantics=("parallel", "parallel"),
            vmem_limit_bytes=_VMEM_LIMIT,
        ),
    )(qkv, qkv)


# ---------------------------------------------------------------------------
# Module-equivalent wrapper
# ---------------------------------------------------------------------------
class MultiheadAttentionPallas:
    """Forward-equivalent of the reference PyTorch MultiheadAttention (mask=None path)."""

    def __init__(self, embed_dim: int, num_heads: int, key):
        assert embed_dim % num_heads == 0
        self.embed_dim = embed_dim
        self.num_heads = num_heads
        self.head_dim = embed_dim // num_heads

        k1, k2 = jax.random.split(key)

        def xavier(k, out_f, in_f):  # xavier_uniform_ on an (out, in) nn.Linear weight
            bound = math.sqrt(6.0 / (in_f + out_f))
            return jax.random.uniform(k, (out_f, in_f), jnp.float32, -bound, bound)

        # f32 master parameters (PyTorch layout; also used by the pure-JAX reference).
        self.w_qkv = xavier(k1, QKV_DIMS * embed_dim, embed_dim)   # (3E, E)
        self.b_qkv = jnp.zeros((QKV_DIMS * embed_dim,), jnp.float32)
        self.w_out = xavier(k2, embed_dim, embed_dim)              # (E, E)
        self.b_out = jnp.zeros((embed_dim,), jnp.float32)

        # Kernel-side parameters:
        #  * pre-transposed to (in, out) so the matmul kernel never transposes weights
        #  * 1/sqrt(Dh) folded into the q columns of the QKV projection (mathematically
        #    identical to dividing the logits by sqrt(d_k) in the reference)
        #  * bf16 MXU operands; biases stay f32.
        col = jnp.arange(QKV_DIMS * embed_dim)
        is_q_col = (col % (QKV_DIMS * self.head_dim)) < self.head_dim
        q_scale = jnp.where(is_q_col, 1.0 / math.sqrt(self.head_dim), 1.0).astype(jnp.float32)
        self._w_qkv_t = (self.w_qkv.T * q_scale[None, :]).astype(jnp.bfloat16)  # (E, 3E)
        self._b_qkv_s = self.b_qkv * q_scale                                    # (3E,) f32
        self._w_out_t = self.w_out.T.astype(jnp.bfloat16)                       # (E, E)

    def __call__(self, x):
        # x: (batch, seq, embed)
        B, S, E = x.shape
        x_bf = x.astype(jnp.bfloat16)

        # 1) fused QKV projection (tiled / pipelined Pallas matmul).
        qkv = _linear(x_bf.reshape(B * S, E), self._w_qkv_t, self._b_qkv_s,
                      out_dtype=jnp.bfloat16)                    # (B*S, 3E)
        # (B, S, 3E) preserves the exact PyTorch reshape(B,S,H,3*Dh)/chunk column order;
        # the attention kernel slices q/k/v per head in VMEM, so no HBM transposes are needed.
        qkv = qkv.reshape(B, S, QKV_DIMS * E)

        # 2) scaled-dot-product attention; values come back already merged to (B, S, E).
        values, attention = _attention(qkv, self.num_heads, self.head_dim)

        # 3) output projection.
        out = _linear(values.reshape(B * S, E), self._w_out_t, self.b_out,
                      out_dtype=jnp.float32).reshape(B, S, E)
        return out, attention


# ---------------------------------------------------------------------------
# Pure-JAX f32 reference (spec math) for the sanity check
# ---------------------------------------------------------------------------
def _reference(module, x):
    B, S, E = x.shape
    H, Dh = module.num_heads, module.head_dim
    qkv = x.reshape(B * S, E) @ module.w_qkv.T + module.b_qkv
    qkv = qkv.reshape(B, S, H, QKV_DIMS * Dh).transpose(0, 2, 1, 3)
    q, k, v = jnp.split(qkv, QKV_DIMS, axis=-1)
    logits = jnp.einsum("bhqd,bhkd->bhqk", q, k) / math.sqrt(Dh)
    attn = jax.nn.softmax(logits, axis=-1)
    vals = jnp.einsum("bhqk,bhkd->bhqd", attn, v)
    vals = vals.transpose(0, 2, 1, 3).reshape(B, S, E)
    out = vals @ module.w_out.T + module.b_out
    return out, attn


if __name__ == "__main__":
    key = jax.random.PRNGKey(0)
    k_param, k_x = jax.random.split(key)

    batch, seq, embed, heads = 2, 8, 32, 4
    mha = MultiheadAttentionPallas(embed_dim=embed, num_heads=heads, key=k_param)
    x = jax.random.normal(k_x, (batch, seq, embed), dtype=jnp.float32)

    out, attn = mha(x)
    out = jax.block_until_ready(out)
    attn = jax.block_until_ready(attn)

    ref_out, ref_attn = _reference(mha, x)
    assert out.shape == (batch, seq, embed)
    assert attn.shape == (batch, heads, seq, seq)
    # bf16 MXU operands + approximate reciprocal in the softmax -> relaxed tolerances vs f32 ref.
    assert jnp.allclose(out, ref_out, atol=3e-2, rtol=3e-2), float(jnp.max(jnp.abs(out - ref_out)))
    assert jnp.allclose(attn, ref_attn, atol=1e-2, rtol=1e-2), float(jnp.max(jnp.abs(attn - ref_attn)))

    print("KERNEL_OK")
</pallas_src>

<mosaic_0001>
module attributes {stable_mosaic.version = 11 : i64} {
  func.func @_linear_kernel(%arg0: i32, %arg1: i32, %arg2: i32, %arg3: memref<16x32xbf16, #tpu.memory_space<vmem>>, %arg4: memref<32x96xbf16, #tpu.memory_space<vmem>>, %arg5: memref<1x96xf32, #tpu.memory_space<vmem>>, %arg6: memref<16x96xbf16, #tpu.memory_space<vmem>>, %arg7: memref<16x96xf32, #tpu.memory_space<vmem>>) attributes {dimension_semantics = [#tpu.dimension_semantics<parallel>, #tpu.dimension_semantics<parallel>, #tpu.dimension_semantics<arbitrary>], iteration_bounds = array<i64: 1, 1, 1>, scalar_prefetch = 0 : i64, scratch_operands = 1 : i64, tpu.core_type = #tpu.core_type<tc>, window_params = [{transform_indices = @transform_0, window_bounds = array<i64: 16, 32>}, {transform_indices = @transform_1, window_bounds = array<i64: 32, 96>}, {transform_indices = @transform_2, window_bounds = array<i64: 1, 96>}, {transform_indices = @transform_3, window_bounds = array<i64: 16, 96>}]} {
    %c0_i32 = arith.constant 0 : i32
    %0 = arith.cmpi eq, %arg2, %c0_i32 : i32
    %1 = arith.extui %0 : i1 to i32
    %c0_i32_0 = arith.constant 0 : i32
    %2 = arith.cmpi ne, %1, %c0_i32_0 : i32
    scf.if %2 {
      %cst_10 = arith.constant 0.000000e+00 : f32
      %12 = vector.broadcast %cst_10 : f32 to vector<16x96xf32>
      %c0_11 = arith.constant 0 : index
      %c0_12 = arith.constant 0 : index
      %13 = vector.load %arg7[%c0_11, %c0_12] : memref<16x96xf32, #tpu.memory_space<vmem>>, vector<16x96xf32>
      tpu.vector_store %arg7[%c0_11, %c0_12], %12 {strides = array<i32>} : memref<16x96xf32, #tpu.memory_space<vmem>>, vector<16x96xf32>,
    } else {
    }
    %c0 = arith.constant 0 : index
    %c0_1 = arith.constant 0 : index
    %3 = vector.load %arg7[%c0, %c0_1] : memref<16x96xf32, #tpu.memory_space<vmem>>, vector<16x96xf32>
    %c0_2 = arith.constant 0 : index
    %c0_3 = arith.constant 0 : index
    %4 = vector.load %arg3[%c0_2, %c0_3] : memref<16x32xbf16, #tpu.memory_space<vmem>>, vector<16x32xbf16>
    %c0_4 = arith.constant 0 : index
    %c0_5 = arith.constant 0 : index
    %5 = vector.load %arg4[%c0_4, %c0_5] : memref<32x96xbf16, #tpu.memory_space<vmem>>, vector<32x96xbf16>
    %cst = arith.constant dense<0.000000e+00> : vector<16x96xf32>
    %6 = tpu.matmul %4, %5, %cst {dimension_numbers = #tpu.dot_dimension_numbers<[1], [0], [0], [1], [0, 0, 1, 1], [], []>} : vector<16x32xbf16>, vector<32x96xbf16>, vector<16x96xf32> -> vector<16x96xf32>
    %7 = arith.addf %3, %6 : vector<16x96xf32>
    %c0_6 = arith.constant 0 : index
    %c0_7 = arith.constant 0 : index
    %8 = vector.load %arg7[%c0_6, %c0_7] : memref<16x96xf32, #tpu.memory_space<vmem>>, vector<16x96xf32>
    tpu.vector_store %arg7[%c0_6, %c0_7], %7 {strides = array<i32>} : memref<16x96xf32, #tpu.memory_space<vmem>>, vector<16x96xf32>,
    %c0_i32_8 = arith.constant 0 : i32
    %9 = arith.cmpi eq, %arg2, %c0_i32_8 : i32
    %10 = arith.extui %9 : i1 to i32
    %c0_i32_9 = arith.constant 0 : i32
    %11 = arith.cmpi ne, %10, %c0_i32_9 : i32
    scf.if %11 {
      %c0_10 = arith.constant 0 : index
      %c0_11 = arith.constant 0 : index
      %12 = vector.load %arg7[%c0_10, %c0_11] : memref<16x96xf32, #tpu.memory_space<vmem>>, vector<16x96xf32>
      %c0_12 = arith.constant 0 : index
      %c0_13 = arith.constant 0 : index
      %13 = vector.load %arg5[%c0_12, %c0_13] : memref<1x96xf32, #tpu.memory_space<vmem>>, vector<1x96xf32>
      %14 = vector.broadcast %13 : vector<1x96xf32> to vector<16x96xf32>
      %15 = arith.addf %12, %14 : vector<16x96xf32>
      %16 = arith.truncf %15 : vector<16x96xf32> to vector<16x96xbf16>
      %c0_14 = arith.constant 0 : index
      %c0_15 = arith.constant 0 : index
      %17 = vector.load %arg6[%c0_14, %c0_15] : memref<16x96xbf16, #tpu.memory_space<vmem>>, vector<16x96xbf16>
      tpu.vector_store %arg6[%c0_14, %c0_15], %16 {strides = array<i32>} : memref<16x96xbf16, #tpu.memory_space<vmem>>, vector<16x96xbf16>,
    } else {
    }
    return
  }
  func.func @transform_0(%arg0: i32, %arg1: i32, %arg2: i32) -> (i32, i32) {
    %c0_i32 = arith.constant 0 : i32
    return %arg0, %arg2 : i32, i32
  }
  func.func @transform_1(%arg0: i32, %arg1: i32, %arg2: i32) -> (i32, i32) {
    %c0_i32 = arith.constant 0 : i32
    return %arg2, %arg1 : i32, i32
  }
  func.func @transform_2(%arg0: i32, %arg1: i32, %arg2: i32) -> (i32, i32) {
    %c0_i32 = arith.constant 0 : i32
    %c0_i32_0 = arith.constant 0 : i32
    return %c0_i32, %arg1 : i32, i32
  }
  func.func @transform_3(%arg0: i32, %arg1: i32, %arg2: i32) -> (i32, i32) {
    %c0_i32 = arith.constant 0 : i32
    return %arg0, %arg1 : i32, i32
  }
}

</mosaic_0001>

<llo_original>
// kernel: tpu_custom_call.1
$region0: #{tpu_custom_call.1}
  #allocation0 [shape = 'u32[]', space=smem, size = 0x4, offset = 0x4, fixed_abs, tag = 'smem constant byte address 0x4 - core index']
  #allocation1 [shape = 'u32[72,128]{1,0:T(1,128)}', space=vmem, size = 0x9000, scoped, tag = 'internal scratch']
  #allocation2 [shape = 'f32[16,96]{1,0:T(8,128)}', space=vmem, size = 0x2000, scoped, tag = 'scratch operand']
  %s0 = inlined_call_operand.hbm [shape: bf16[16,32], index: 0, kind: input, shape index: {}]
  %s1 = inlined_call_operand.hbm [shape: bf16[32,96], index: 1, kind: input, shape index: {}]
  %s2 = inlined_call_operand.vmem [shape: f32[1,96], index: 2, kind: input, shape index: {}]
  %s3 = inlined_call_operand.hbm [shape: bf16[16,96], index: 3, kind: output, shape index: {}]
  %s4 = sld [smem:[#allocation0]]
  $region38: #{tpu_custom_call.1} parent=0
    _
  %s6 = ssub.s32 1, %s4
  %s7 = scalar_select 0, %s6, %s4
  $region1: #{tpu_custom_call.1} parent=0
    #allocation3 [shape = 'u8[4096]{0}', space=vmem, size = 0x1000, scoped, tag = 'input window, operand 0, single buffered']
    #allocation4 [shape = 's32[1]{0}', space=sflag, size = 0x4, scoped, tag = 'scoped memory for tpu_custom_call.1']
    #allocation5 [shape = 's32[1]{0}', space=sflag, size = 0x4, scoped, tag = 'scoped memory for tpu_custom_call.1']
    #allocation6 [shape = 'u8[8192]{0}', space=vmem, size = 0x2000, scoped, tag = 'input window, operand 1, single buffered']
    #allocation7 [shape = 's32[1]{0}', space=sflag, size = 0x4, scoped, tag = 'scoped memory for tpu_custom_call.1']
    #allocation8 [shape = 'u8[4096]{0}', space=vmem, size = 0x1000, scoped, tag = 'output window, operand 0, single buffered']
    %8 = vsyncpa [#allocation4], 0
    %9 = vsyncpa [#allocation7], 0
    %10 = vsyncpa [#allocation5], 0
    // Predicated region
    $region2: #{tpu_custom_call.1} parent=1 // pred_check
      _
    $region3: #{tpu_custom_call.1} parent=1 // pred_check_branch
      %12 = sbr.rel (0) target = $region5
    $region4: #{tpu_custom_call.1} parent=1 // pred_region
      %14 = vsyncadd [#allocation4], 0
      %s15 = sshll.u32 %s0, 4
      %s16 = int_to_ptr.hbm [resolvable:$true] %s15
      %s17 = sshll.u32 [#allocation3], 4
      %s18 = int_to_ptr.vmem [resolvable:$true] %s17
      %23 = dma.hbm_to_vmem [thread:$0]  %s16, 128, %s18, [#allocation4], 64, 64, 4
    $region5: #{tpu_custom_call.1} parent=1 // pred_fallthru
      _
    // Predicated region
    $region6: #{tpu_custom_call.1} parent=1 // pred_check
      _
    $region7: #{tpu_custom_call.1} parent=1 // pred_check_branch
      %25 = sbr.rel (0) target = $region9
    $region8: #{tpu_custom_call.1} parent=1 // pred_region
      %27 = vsyncadd [#allocation7], 0
      %s28 = sshll.u32 %s1, 4
      %s29 = int_to_ptr.hbm [resolvable:$true] %s28
      %s30 = sshll.u32 [#allocation6], 4
      %s31 = int_to_ptr.vmem [resolvable:$true] %s30
      %36 = dma.hbm_to_vmem [thread:$0]  %s29, 256, %s31, [#allocation7], 64, 64, 4
    $region9: #{tpu_custom_call.1} parent=1 // pred_fallthru
      _
    // Predicated region
    $region10: #{tpu_custom_call.1} parent=1 // pred_check
      _
    $region11: #{tpu_custom_call.1} parent=1 // pred_check_branch
      %38 = sbr.rel (0) target = $region13
    $region12: #{tpu_custom_call.1} parent=1 // pred_region
      _
    $region13: #{tpu_custom_call.1} parent=1 // pred_fallthru
      _
    // Predicated region
    $region14: #{tpu_custom_call.1} parent=1 // pred_check
      _
    $region15: #{tpu_custom_call.1} parent=1 // pred_check_branch
      %40 = sbr.rel (0) target = $region17
    $region16: #{tpu_custom_call.1} parent=1 // pred_region
      %42 = dma.done [#allocation4], 128
    $region17: #{tpu_custom_call.1} parent=1 // pred_fallthru
      _
    // Predicated region
    $region18: #{tpu_custom_call.1} parent=1 // pred_check
      _
    $region19: #{tpu_custom_call.1} parent=1 // pred_check_branch
      %44 = sbr.rel (0) target = $region21
    $region20: #{tpu_custom_call.1} parent=1 // pred_region
      %46 = dma.done [#allocation7], 256
    $region21: #{tpu_custom_call.1} parent=1 // pred_fallthru
      _
    %p48 = scmp.eq.s32.totalorder 0, 0
    // Predicated region
    $region22: #{tpu_custom_call.1} parent=1 // pred_check
      %p49 = pneg %p48
    $region23: #{tpu_custom_call.1} parent=1 // pred_check_branch
      %51 = sbr.rel (%p49) target = $region25
    $region24: #{tpu_custom_call.1} parent=1 // pred_region
      %vm52 = vcmask 785408
      %53 = vst.msk [vmem:[#allocation2] sm:$0xff] %vm52, 0.0
      %54 = vst.msk [vmem:[#allocation2 + $0x8] sm:$0xff] %vm52, 0.0
    $region25: #{tpu_custom_call.1} parent=1 // pred_fallthru
      _
    %v55 = vld [vmem:[#allocation2] sm:$0xff]
    %v56 = vld [vmem:[#allocation2 + $0x8] sm:$0xff]
    %v57 = vld [vmem:[#allocation3] sm:$0xf]
    %v58 = vld [vmem:[#allocation3 + $0x4] sm:$0xf]
    %v59 = vld [vmem:[#allocation6] sm:$0xf]
    %v60 = vld [vmem:[#allocation6 + $0x4] sm:$0xf]
    %v61 = vld [vmem:[#allocation6 + $0x8] sm:$0xf]
    %v62 = vld [vmem:[#allocation6 + $0xc] sm:$0xf]
    %v65 = vunpack.c.l.b16 %v57
    %v66 = vunpack.c.l.b16 %v58
    %v67 = vpack.c.b16 %v66, %v65
    %v72 = vunpack.c.l.b16 %v59
    %v73 = vunpack.c.l.b16 %v60
    %v74 = vunpack.c.l.b16 %v61
    %v75 = vunpack.c.l.b16 %v62
    %v76 = vpack.c.b16 %v73, %v72
    %v77 = vpack.c.b16 %v75, %v74
    %vm80 = vcmask 261120
    %v82 = vsel %vm80, %v67, 0
    %84 = vmatpush.bf16.msra.mxu0 0
    %85 = vmatpush.bf16.msra.mxu0 0
    %86 = vmatpush.bf16.msra.mxu0 0
    %87 = vmatpush.bf16.msra.mxu0 0
    %88 = vmatpush.bf16.msra.mxu0 0
    %89 = vmatpush.bf16.msra.mxu0 0
    %90 = vmatpush.bf16.msra.mxu0 %v77
    %91 = vmatpush.bf16.msra.mxu0 %v76
    %92 = vmatmul.bf16.gmra.mxu0 %v82
    %v93 = vpop.f32.mrf.mxu0
    %v94 = vadd.f32 0.0, %v93
    %v95 = vpop.f32.mrf.mxu0
    %v96 = vadd.f32 0.0, %v95
    %97 = vdwg.mxu0
    %v98 = vadd.f32 %v55, %v94
    %v99 = vadd.f32 %v56, %v96
    %vm100 = vcmask 785408
    %101 = vst.msk [vmem:[#allocation2] sm:$0xff] %vm100, %v98
    %102 = vst.msk [vmem:[#allocation2 + $0x8] sm:$0xff] %vm100, %v99
    // Predicated region
    $region26: #{tpu_custom_call.1} parent=1 // pred_check
      %p103 = pneg %p48
    $region27: #{tpu_custom_call.1} parent=1 // pred_check_branch
      %105 = sbr.rel (%p103) target = $region29
    $region28: #{tpu_custom_call.1} parent=1 // pred_region
      %v106 = vld [vmem:[#allocation2] sm:$0xff]
      %v107 = vld [vmem:[#allocation2 + $0x8] sm:$0xff]
      %v108 = vld [vmem:[%s2] sm:$0x1]
      %v110 = vperm.slane %v108, 0
      %v112 = vadd.f32 %v106, %v110
      %v113 = vadd.f32 %v107, %v110
      %v114 = vpack.c.bf16 %v112, %v112
      %v115 = vpack.c.bf16 %v113, %v113
      %vm116 = vcmask 781312
      %117 = vst.msk [vmem:[#allocation8] sm:$0xf] %vm116, %v114
      %118 = vst.msk [vmem:[#allocation8 + $0x4] sm:$0xf] %vm116, %v115
    $region29: #{tpu_custom_call.1} parent=1 // pred_fallthru
      _
    // Predicated region
    $region30: #{tpu_custom_call.1} parent=1 // pred_check
      _
    $region31: #{tpu_custom_call.1} parent=1 // pred_check_branch
      %120 = sbr.rel (0) target = $region33
    $region32: #{tpu_custom_call.1} parent=1 // pred_region
      %122 = vsyncadd [#allocation5], 0
      %s123 = sshll.u32 [#allocation8], 4
      %s124 = int_to_ptr.vmem [resolvable:$true] %s123
      %s125 = sshll.u32 %s3, 4
      %s126 = int_to_ptr.hbm [resolvable:$true] %s125
      %131 = dma.vmem_to_hbm [thread:$0]  %s124, 128, %s126, [#allocation5], 64, 64, 4
    $region33: #{tpu_custom_call.1} parent=1 // pred_fallthru
      _
    // Predicated region
    $region34: #{tpu_custom_call.1} parent=1 // pred_check
      _
    $region35: #{tpu_custom_call.1} parent=1 // pred_check_branch
      %133 = sbr.rel (0) target = $region37
    $region36: #{tpu_custom_call.1} parent=1 // pred_region
      %135 = dma.done [#allocation5], 128
    $region37: #{tpu_custom_call.1} parent=1 // pred_fallthru
      _
    %136 = vsyncpa [#allocation4], 1
    %137 = vsyncpa [#allocation7], 1
    %138 = vsyncpa [#allocation5], 1

</llo_original>
